<compile_context>
chip_gen: v6e
topology: v6e:2x2x1
jax: 0.10.0
libtpu: 0.0.40
codegen_flags: <defaults>
</compile_context>

<pallas_src>
import functools

import jax
import jax.numpy as jnp
from jax.experimental import pallas as pl
from jax.experimental.pallas import tpu as pltpu

BN_EPS = 1e-5
NEG_SLOPE = 0.01  # PyTorch F.leaky_relu default
LANE = 128


def _round_up(n, m):
    return (n + m - 1) // m * m


def _leaky_relu(h):
    return jnp.where(h >= 0, h, NEG_SLOPE * h)


# ---------------------------------------------------------------------------
# Kernel: 5 fused (bf16 matmul -> f32 bias add -> leaky_relu) layers, BN folded.
# ---------------------------------------------------------------------------
def dqn_kernel(x_ref,
               w1_ref, b1_ref, w2_ref, b2_ref, w3_ref, b3_ref,
               w4_ref, b4_ref, w5_ref, b5_ref,
               out_ref):
    def linear(h, w_ref, b_ref):
        return (jnp.dot(h.astype(jnp.bfloat16), w_ref[...],
                        preferred_element_type=jnp.float32)
                + b_ref[...])

    h = x_ref[...]
    h = _leaky_relu(linear(h, w1_ref, b1_ref))   # fc1 (bn1 folded into fc2)
    h = _leaky_relu(linear(h, w2_ref, b2_ref))   # fc2 (bn2 folded into fc3)
    h = _leaky_relu(linear(h, w3_ref, b3_ref))   # fc3 (bn3 folded into fc4)
    h = _leaky_relu(linear(h, w4_ref, b4_ref))   # fc4 (bn4 folded into fc5)
    out_ref[...] = linear(h, w5_ref, b5_ref)     # fc5 (8-wide output block)


# ---------------------------------------------------------------------------
# Parameter construction / folding
# ---------------------------------------------------------------------------
def init_params(key, state_size, action_size):
    """Deterministic synthetic parameters matching the PyTorch module shapes."""
    dims = [state_size, 200, 128, 64, 64, action_size]
    params = {}
    keys = jax.random.split(key, 32)
    ki = 0
    for li in range(5):
        fan_in, fan_out = dims[li], dims[li + 1]
        std = (2.0 / (fan_in * (1.0 + NEG_SLOPE ** 2))) ** 0.5
        params[f"w{li+1}"] = (
            jax.random.normal(keys[ki], (fan_in, fan_out), jnp.float32) * std)
        ki += 1
        params[f"b{li+1}"] = (
            jax.random.uniform(keys[ki], (1, fan_out), jnp.float32, -0.05, 0.05))
        ki += 1
    for li in range(4):  # bn1..bn4 (eval-mode running stats + affine)
        dim = dims[li + 1]
        params[f"g{li+1}"] = 1.0 + 0.1 * jax.random.normal(
            keys[ki], (1, dim), jnp.float32)
        ki += 1
        params[f"be{li+1}"] = 0.1 * jax.random.normal(keys[ki], (1, dim), jnp.float32)
        ki += 1
        params[f"rm{li+1}"] = 0.1 * jax.random.normal(keys[ki], (1, dim), jnp.float32)
        ki += 1
        params[f"rv{li+1}"] = jnp.abs(
            1.0 + 0.1 * jax.random.normal(keys[ki], (1, dim), jnp.float32))
        ki += 1
    return params


def fold_and_pad_params(params):
    """Fold eval-mode BN into the following Linear and zero-pad for lane density.

    Returns (w1, b1, ..., w5, b5); weights bf16, biases f32 (shape (1, N)).
    Padding is exact: leaky_relu(0) = 0 and zero weight rows/cols contribute 0.
    """
    w = [params[f"w{i}"].astype(jnp.float32) for i in range(1, 6)]
    b = [params[f"b{i}"].astype(jnp.float32) for i in range(1, 6)]

    # BN_l(h) = h*scale + shift ;  (h*scale + shift) @ W + b
    #         = h @ (scale.T * W) + (shift @ W + b)
    for l in range(4):
        scale = params[f"g{l+1}"] * jax.lax.rsqrt(params[f"rv{l+1}"] + BN_EPS)
        shift = params[f"be{l+1}"] - params[f"rm{l+1}"] * scale
        b[l + 1] = b[l + 1] + shift @ w[l + 1]       # uses original W
        w[l + 1] = scale.reshape(-1, 1) * w[l + 1]   # row-scale W

    def pad_boundary(l, target):
        """Zero-pad layer l's output dim (w[l] cols, b[l]) and w[l+1] rows."""
        cur = w[l].shape[1]
        if target > cur:
            w[l] = jnp.pad(w[l], ((0, 0), (0, target - cur)))
            b[l] = jnp.pad(b[l], ((0, 0), (0, target - cur)))
            if l + 1 < len(w):
                w[l + 1] = jnp.pad(w[l + 1], ((0, target - cur), (0, 0)))

    pad_boundary(0, _round_up(w[0].shape[1], LANE))  # 200 -> 256
    pad_boundary(1, _round_up(w[1].shape[1], LANE))  # 128 -> 128 (no-op)
    pad_boundary(2, _round_up(w[2].shape[1], LANE))  # 64  -> 128
    pad_boundary(3, _round_up(w[3].shape[1], LANE))  # 64  -> 128
    pad_boundary(4, _round_up(w[4].shape[1], 8))     # action 5 -> 8 (small writeback)

    w = [wi.astype(jnp.bfloat16) for wi in w]
    flat = []
    for wi, bi in zip(w, b):
        flat.extend([wi, bi])
    return tuple(flat)


# ---------------------------------------------------------------------------
# Pallas wrapper
# ---------------------------------------------------------------------------
@functools.partial(jax.jit, static_argnames=("action_size", "tile_b"))
def dqn_forward(x, folded, action_size, tile_b=2048):
    """Eval-mode forward: x (batch, state_size) f32 -> (batch, action_size) f32."""
    batch, state = x.shape
    (w1, b1, w2, b2, w3, b3, w4, b4, w5, b5) = folded
    out_pad = w5.shape[1]

    # Batch tile: large (amortizes ~0.35us per-step overhead), multiple of 8,
    # and capped at half the rounded batch so the grid has >=2 steps whenever
    # possible -> both v7x TensorCores are used ("parallel" batch axis).
    b8 = _round_up(batch, 8)
    half = _round_up(b8 // 2, 8) if b8 >= 16 else b8
    tb = _round_up(max(8, min(tile_b, half)), 8)
    padded_b = _round_up(batch, tb)
    if padded_b != batch:
        x = jnp.pad(x, ((0, padded_b - batch), (0, 0)))
    grid = (padded_b // tb,)

    def resident(arr):
        # Full-array block, same block every grid step -> weight stays in VMEM.
        return pl.BlockSpec(arr.shape, lambda i: (0, 0))

    weights = (w1, b1, w2, b2, w3, b3, w4, b4, w5, b5)
    in_specs = [pl.BlockSpec((tb, state), lambda i: (i, 0))]
    in_specs += [resident(a) for a in weights]
    out_spec = pl.BlockSpec((tb, out_pad), lambda i: (i, 0))

    # VMEM budget scales with the tile; clamp to <=32 MiB (safe on v7x's 64 MiB).
    weight_bytes = sum(a.size * a.dtype.itemsize for a in weights)
    io_bytes = 2 * tb * (state + out_pad) * 4            # double-buffered x / out tiles
    act_bytes = 4 * tb * w1.shape[1] * 4                 # live activation headroom
    vmem_limit = int(min(32 * 1024 * 1024,
                         max(16 * 1024 * 1024,
                             1.5 * (weight_bytes + io_bytes + act_bytes))))

    flops = 2 * padded_b * sum(wi.shape[0] * wi.shape[1]
                               for wi in (w1, w2, w3, w4, w5))
    bytes_accessed = (padded_b * state * 4 + weight_bytes + padded_b * out_pad * 4)

    out = pl.pallas_call(
        dqn_kernel,
        out_shape=jax.ShapeDtypeStruct((padded_b, out_pad), jnp.float32),
        grid=grid,
        in_specs=in_specs,
        out_specs=out_spec,
        compiler_params=pltpu.CompilerParams(
            dimension_semantics=("parallel",),
            vmem_limit_bytes=vmem_limit,
        ),
        cost_estimate=pl.CostEstimate(
            flops=flops, transcendentals=0, bytes_accessed=bytes_accessed),
    )(x, *weights)

    return out[:batch, :action_size]


def dqn_forward_ref(x, params):
    """Pure-JAX eval-mode reference (unfolded, f32) for correctness checking."""
    h = x
    for li in range(1, 5):
        h = jnp.dot(h, params[f"w{li}"]) + params[f"b{li}"]
        h = jnp.where(h >= 0, h, NEG_SLOPE * h)
        h = (h - params[f"rm{li}"]) * jax.lax.rsqrt(params[f"rv{li}"] + BN_EPS)
        h = h * params[f"g{li}"] + params[f"be{li}"]
    return jnp.dot(h, params["w5"]) + params["b5"]


if __name__ == "__main__":
    STATE_SIZE = 24   # e.g. LIDAR scan features
    ACTION_SIZE = 5
    BATCH = 8

    key = jax.random.PRNGKey(0)
    kx, kp = jax.random.split(key)
    x = jax.random.normal(kx, (BATCH, STATE_SIZE), jnp.float32)
    params = init_params(kp, STATE_SIZE, ACTION_SIZE)
    folded = fold_and_pad_params(params)

    out = jax.block_until_ready(dqn_forward(x, folded, ACTION_SIZE))
    ref = dqn_forward_ref(x, params)
    assert out.shape == (BATCH, ACTION_SIZE), out.shape
    # bf16 weights + BN folding -> loose tolerance vs. the full-f32 reference.
    assert jnp.allclose(out, ref, atol=1e-1, rtol=5e-2), (
        "mismatch vs reference, max |diff| = %f" % float(jnp.max(jnp.abs(out - ref))))

    # Exercise the multi-step grid with batch padding (small explicit tile).
    x2 = jax.random.normal(jax.random.PRNGKey(1), (40, STATE_SIZE), jnp.float32)
    out2 = jax.block_until_ready(dqn_forward(x2, folded, ACTION_SIZE, tile_b=16))
    ref2 = dqn_forward_ref(x2, params)
    assert out2.shape == (40, ACTION_SIZE), out2.shape
    assert jnp.allclose(out2, ref2, atol=1e-1, rtol=5e-2), "grid-path mismatch"

    # Exercise the auto-derived tile (>=2 grid steps -> both v7x cores busy).
    x3 = jax.random.normal(jax.random.PRNGKey(2), (300, STATE_SIZE), jnp.float32)
    out3 = jax.block_until_ready(dqn_forward(x3, folded, ACTION_SIZE))
    ref3 = dqn_forward_ref(x3, params)
    assert out3.shape == (300, ACTION_SIZE), out3.shape
    assert jnp.allclose(out3, ref3, atol=1e-1, rtol=5e-2), "auto-tile mismatch"

    print("KERNEL_OK")
</pallas_src>

<mosaic_0001>
module attributes {stable_mosaic.version = 11 : i64} {
  func.func @dqn_kernel(%arg0: i32, %arg1: memref<8x24xf32, #tpu.memory_space<vmem>>, %arg2: memref<24x256xbf16, #tpu.memory_space<vmem>>, %arg3: memref<1x256xf32, #tpu.memory_space<vmem>>, %arg4: memref<256x128xbf16, #tpu.memory_space<vmem>>, %arg5: memref<1x128xf32, #tpu.memory_space<vmem>>, %arg6: memref<128x128xbf16, #tpu.memory_space<vmem>>, %arg7: memref<1x128xf32, #tpu.memory_space<vmem>>, %arg8: memref<128x128xbf16, #tpu.memory_space<vmem>>, %arg9: memref<1x128xf32, #tpu.memory_space<vmem>>, %arg10: memref<128x8xbf16, #tpu.memory_space<vmem>>, %arg11: memref<1x8xf32, #tpu.memory_space<vmem>>, %arg12: memref<8x8xf32, #tpu.memory_space<vmem>>) attributes {dimension_semantics = [#tpu.dimension_semantics<parallel>], iteration_bounds = array<i64: 1>, scalar_prefetch = 0 : i64, scratch_operands = 0 : i64, tpu.core_type = #tpu.core_type<tc>, window_params = [{transform_indices = @transform_0, window_bounds = array<i64: 8, 24>}, {pipeline_mode = #tpu.pipeline_mode<synchronous>, transform_indices = @transform_1, window_bounds = array<i64: 24, 256>}, {pipeline_mode = #tpu.pipeline_mode<synchronous>, transform_indices = @transform_2, window_bounds = array<i64: 1, 256>}, {pipeline_mode = #tpu.pipeline_mode<synchronous>, transform_indices = @transform_3, window_bounds = array<i64: 256, 128>}, {pipeline_mode = #tpu.pipeline_mode<synchronous>, transform_indices = @transform_4, window_bounds = array<i64: 1, 128>}, {pipeline_mode = #tpu.pipeline_mode<synchronous>, transform_indices = @transform_5, window_bounds = array<i64: 128, 128>}, {pipeline_mode = #tpu.pipeline_mode<synchronous>, transform_indices = @transform_6, window_bounds = array<i64: 1, 128>}, {pipeline_mode = #tpu.pipeline_mode<synchronous>, transform_indices = @transform_7, window_bounds = array<i64: 128, 128>}, {pipeline_mode = #tpu.pipeline_mode<synchronous>, transform_indices = @transform_8, window_bounds = array<i64: 1, 128>}, {pipeline_mode = #tpu.pipeline_mode<synchronous>, transform_indices = @transform_9, window_bounds = array<i64: 128, 8>}, {pipeline_mode = #tpu.pipeline_mode<synchronous>, transform_indices = @transform_10, window_bounds = array<i64: 1, 8>}, {transform_indices = @transform_11, window_bounds = array<i64: 8, 8>}]} {
    %c0 = arith.constant 0 : index
    %c0_0 = arith.constant 0 : index
    %0 = vector.load %arg1[%c0, %c0_0] : memref<8x24xf32, #tpu.memory_space<vmem>>, vector<8x24xf32>
    %1 = arith.truncf %0 : vector<8x24xf32> to vector<8x24xbf16>
    %c0_1 = arith.constant 0 : index
    %c0_2 = arith.constant 0 : index
    %2 = vector.load %arg2[%c0_1, %c0_2] : memref<24x256xbf16, #tpu.memory_space<vmem>>, vector<24x256xbf16>
    %cst = arith.constant dense<0.000000e+00> : vector<8x256xf32>
    %3 = tpu.matmul %1, %2, %cst {dimension_numbers = #tpu.dot_dimension_numbers<[1], [0], [0], [1], [0, 0, 1, 1], [], []>} : vector<8x24xbf16>, vector<24x256xbf16>, vector<8x256xf32> -> vector<8x256xf32>
    %c0_3 = arith.constant 0 : index
    %c0_4 = arith.constant 0 : index
    %4 = vector.load %arg3[%c0_3, %c0_4] : memref<1x256xf32, #tpu.memory_space<vmem>>, vector<1x256xf32>
    %5 = vector.broadcast %4 : vector<1x256xf32> to vector<8x256xf32>
    %6 = arith.addf %3, %5 : vector<8x256xf32>
    %cst_5 = arith.constant 0.000000e+00 : f32
    %7 = vector.broadcast %cst_5 : f32 to vector<8x256xf32>
    %8 = arith.cmpf oge, %6, %7 : vector<8x256xf32>
    %cst_6 = arith.constant 0.00999999977 : f32
    %9 = vector.broadcast %cst_6 : f32 to vector<8x256xf32>
    %10 = arith.mulf %9, %6 : vector<8x256xf32>
    %11 = arith.select %8, %6, %10 : vector<8x256xi1>, vector<8x256xf32>
    %12 = arith.truncf %11 : vector<8x256xf32> to vector<8x256xbf16>
    %c0_7 = arith.constant 0 : index
    %c0_8 = arith.constant 0 : index
    %13 = vector.load %arg4[%c0_7, %c0_8] : memref<256x128xbf16, #tpu.memory_space<vmem>>, vector<256x128xbf16>
    %cst_9 = arith.constant dense<0.000000e+00> : vector<8x128xf32>
    %14 = tpu.matmul %12, %13, %cst_9 {dimension_numbers = #tpu.dot_dimension_numbers<[1], [0], [0], [1], [0, 0, 1, 1], [], []>} : vector<8x256xbf16>, vector<256x128xbf16>, vector<8x128xf32> -> vector<8x128xf32>
    %c0_10 = arith.constant 0 : index
    %c0_11 = arith.constant 0 : index
    %15 = vector.load %arg5[%c0_10, %c0_11] : memref<1x128xf32, #tpu.memory_space<vmem>>, vector<1x128xf32>
    %16 = vector.broadcast %15 : vector<1x128xf32> to vector<8x128xf32>
    %17 = arith.addf %14, %16 : vector<8x128xf32>
    %cst_12 = arith.constant 0.000000e+00 : f32
    %18 = vector.broadcast %cst_12 : f32 to vector<8x128xf32>
    %19 = arith.cmpf oge, %17, %18 : vector<8x128xf32>
    %cst_13 = arith.constant 0.00999999977 : f32
    %20 = vector.broadcast %cst_13 : f32 to vector<8x128xf32>
    %21 = arith.mulf %20, %17 : vector<8x128xf32>
    %22 = arith.select %19, %17, %21 : vector<8x128xi1>, vector<8x128xf32>
    %23 = arith.truncf %22 : vector<8x128xf32> to vector<8x128xbf16>
    %c0_14 = arith.constant 0 : index
    %c0_15 = arith.constant 0 : index
    %24 = vector.load %arg6[%c0_14, %c0_15] : memref<128x128xbf16, #tpu.memory_space<vmem>>, vector<128x128xbf16>
    %cst_16 = arith.constant dense<0.000000e+00> : vector<8x128xf32>
    %25 = tpu.matmul %23, %24, %cst_16 {dimension_numbers = #tpu.dot_dimension_numbers<[1], [0], [0], [1], [0, 0, 1, 1], [], []>} : vector<8x128xbf16>, vector<128x128xbf16>, vector<8x128xf32> -> vector<8x128xf32>
    %c0_17 = arith.constant 0 : index
    %c0_18 = arith.constant 0 : index
    %26 = vector.load %arg7[%c0_17, %c0_18] : memref<1x128xf32, #tpu.memory_space<vmem>>, vector<1x128xf32>
    %27 = vector.broadcast %26 : vector<1x128xf32> to vector<8x128xf32>
    %28 = arith.addf %25, %27 : vector<8x128xf32>
    %cst_19 = arith.constant 0.000000e+00 : f32
    %29 = vector.broadcast %cst_19 : f32 to vector<8x128xf32>
    %30 = arith.cmpf oge, %28, %29 : vector<8x128xf32>
    %cst_20 = arith.constant 0.00999999977 : f32
    %31 = vector.broadcast %cst_20 : f32 to vector<8x128xf32>
    %32 = arith.mulf %31, %28 : vector<8x128xf32>
    %33 = arith.select %30, %28, %32 : vector<8x128xi1>, vector<8x128xf32>
    %34 = arith.truncf %33 : vector<8x128xf32> to vector<8x128xbf16>
    %c0_21 = arith.constant 0 : index
    %c0_22 = arith.constant 0 : index
    %35 = vector.load %arg8[%c0_21, %c0_22] : memref<128x128xbf16, #tpu.memory_space<vmem>>, vector<128x128xbf16>
    %cst_23 = arith.constant dense<0.000000e+00> : vector<8x128xf32>
    %36 = tpu.matmul %34, %35, %cst_23 {dimension_numbers = #tpu.dot_dimension_numbers<[1], [0], [0], [1], [0, 0, 1, 1], [], []>} : vector<8x128xbf16>, vector<128x128xbf16>, vector<8x128xf32> -> vector<8x128xf32>
    %c0_24 = arith.constant 0 : index
    %c0_25 = arith.constant 0 : index
    %37 = vector.load %arg9[%c0_24, %c0_25] : memref<1x128xf32, #tpu.memory_space<vmem>>, vector<1x128xf32>
    %38 = vector.broadcast %37 : vector<1x128xf32> to vector<8x128xf32>
    %39 = arith.addf %36, %38 : vector<8x128xf32>
    %cst_26 = arith.constant 0.000000e+00 : f32
    %40 = vector.broadcast %cst_26 : f32 to vector<8x128xf32>
    %41 = arith.cmpf oge, %39, %40 : vector<8x128xf32>
    %cst_27 = arith.constant 0.00999999977 : f32
    %42 = vector.broadcast %cst_27 : f32 to vector<8x128xf32>
    %43 = arith.mulf %42, %39 : vector<8x128xf32>
    %44 = arith.select %41, %39, %43 : vector<8x128xi1>, vector<8x128xf32>
    %45 = arith.truncf %44 : vector<8x128xf32> to vector<8x128xbf16>
    %c0_28 = arith.constant 0 : index
    %c0_29 = arith.constant 0 : index
    %46 = vector.load %arg10[%c0_28, %c0_29] : memref<128x8xbf16, #tpu.memory_space<vmem>>, vector<128x8xbf16>
    %cst_30 = arith.constant dense<0.000000e+00> : vector<8x8xf32>
    %47 = tpu.matmul %45, %46, %cst_30 {dimension_numbers = #tpu.dot_dimension_numbers<[1], [0], [0], [1], [0, 0, 1, 1], [], []>} : vector<8x128xbf16>, vector<128x8xbf16>, vector<8x8xf32> -> vector<8x8xf32>
    %c0_31 = arith.constant 0 : index
    %c0_32 = arith.constant 0 : index
    %48 = vector.load %arg11[%c0_31, %c0_32] : memref<1x8xf32, #tpu.memory_space<vmem>>, vector<1x8xf32>
    %49 = vector.broadcast %48 : vector<1x8xf32> to vector<8x8xf32>
    %50 = arith.addf %47, %49 : vector<8x8xf32>
    %c0_33 = arith.constant 0 : index
    %c0_34 = arith.constant 0 : index
    %51 = vector.load %arg12[%c0_33, %c0_34] : memref<8x8xf32, #tpu.memory_space<vmem>>, vector<8x8xf32>
    tpu.vector_store %arg12[%c0_33, %c0_34], %50 {strides = array<i32>} : memref<8x8xf32, #tpu.memory_space<vmem>>, vector<8x8xf32>,
    return
  }
  func.func @transform_0(%arg0: i32) -> (i32, i32) {
    %c0_i32 = arith.constant 0 : i32
    %c0_i32_0 = arith.constant 0 : i32
    return %arg0, %c0_i32 : i32, i32
  }
  func.func @transform_1(%arg0: i32) -> (i32, i32) {
    %c0_i32 = arith.constant 0 : i32
    %c0_i32_0 = arith.constant 0 : i32
    %c0_i32_1 = arith.constant 0 : i32
    return %c0_i32, %c0_i32_0 : i32, i32
  }
  func.func @transform_2(%arg0: i32) -> (i32, i32) {
    %c0_i32 = arith.constant 0 : i32
    %c0_i32_0 = arith.constant 0 : i32
    %c0_i32_1 = arith.constant 0 : i32
    return %c0_i32, %c0_i32_0 : i32, i32
  }
  func.func @transform_3(%arg0: i32) -> (i32, i32) {
    %c0_i32 = arith.constant 0 : i32
    %c0_i32_0 = arith.constant 0 : i32
    %c0_i32_1 = arith.constant 0 : i32
    return %c0_i32, %c0_i32_0 : i32, i32
  }
  func.func @transform_4(%arg0: i32) -> (i32, i32) {
    %c0_i32 = arith.constant 0 : i32
    %c0_i32_0 = arith.constant 0 : i32
    %c0_i32_1 = arith.constant 0 : i32
    return %c0_i32, %c0_i32_0 : i32, i32
  }
  func.func @transform_5(%arg0: i32) -> (i32, i32) {
    %c0_i32 = arith.constant 0 : i32
    %c0_i32_0 = arith.constant 0 : i32
    %c0_i32_1 = arith.constant 0 : i32
    return %c0_i32, %c0_i32_0 : i32, i32
  }
  func.func @transform_6(%arg0: i32) -> (i32, i32) {
    %c0_i32 = arith.constant 0 : i32
    %c0_i32_0 = arith.constant 0 : i32
    %c0_i32_1 = arith.constant 0 : i32
    return %c0_i32, %c0_i32_0 : i32, i32
  }
  func.func @transform_7(%arg0: i32) -> (i32, i32) {
    %c0_i32 = arith.constant 0 : i32
    %c0_i32_0 = arith.constant 0 : i32
    %c0_i32_1 = arith.constant 0 : i32
    return %c0_i32, %c0_i32_0 : i32, i32
  }
  func.func @transform_8(%arg0: i32) -> (i32, i32) {
    %c0_i32 = arith.constant 0 : i32
    %c0_i32_0 = arith.constant 0 : i32
    %c0_i32_1 = arith.constant 0 : i32
    return %c0_i32, %c0_i32_0 : i32, i32
  }
  func.func @transform_9(%arg0: i32) -> (i32, i32) {
    %c0_i32 = arith.constant 0 : i32
    %c0_i32_0 = arith.constant 0 : i32
    %c0_i32_1 = arith.constant 0 : i32
    return %c0_i32, %c0_i32_0 : i32, i32
  }
  func.func @transform_10(%arg0: i32) -> (i32, i32) {
    %c0_i32 = arith.constant 0 : i32
    %c0_i32_0 = arith.constant 0 : i32
    %c0_i32_1 = arith.constant 0 : i32
    return %c0_i32, %c0_i32_0 : i32, i32
  }
  func.func @transform_11(%arg0: i32) -> (i32, i32) {
    %c0_i32 = arith.constant 0 : i32
    %c0_i32_0 = arith.constant 0 : i32
    return %arg0, %c0_i32 : i32, i32
  }
}

</mosaic_0001>

<llo_original>
// kernel: dqn_forward.1
$region0: #{dqn_forward.1}
  #allocation0 [shape = 'u32[]', space=smem, size = 0x4, offset = 0x4, fixed_abs, tag = 'smem constant byte address 0x4 - core index']
  #allocation1 [shape = 'u32[144,128]{1,0:T(1,128)}', space=vmem, size = 0x12000, scoped, tag = 'internal scratch']
  %s0 = inlined_call_operand.vmem [shape: f32[8,24], index: 0, kind: input, shape index: {}]
  %s1 = inlined_call_operand.hbm [shape: bf16[24,256], index: 1, kind: input, shape index: {}]
  %s2 = inlined_call_operand.vmem [shape: f32[1,256], index: 2, kind: input, shape index: {}]
  %s3 = inlined_call_operand.hbm [shape: bf16[256,128], index: 3, kind: input, shape index: {}]
  %s4 = inlined_call_operand.hbm [shape: f32[1,128], index: 4, kind: input, shape index: {}]
  %s5 = inlined_call_operand.vmem [shape: bf16[128,128], index: 5, kind: input, shape index: {}]
  %s6 = inlined_call_operand.hbm [shape: f32[1,128], index: 6, kind: input, shape index: {}]
  %s7 = inlined_call_operand.hbm [shape: bf16[128,128], index: 7, kind: input, shape index: {}]
  %s8 = inlined_call_operand.vmem [shape: f32[1,128], index: 8, kind: input, shape index: {}]
  %s9 = inlined_call_operand.vmem [shape: bf16[128,8], index: 9, kind: input, shape index: {}]
  %s10 = inlined_call_operand.vmem [shape: f32[1,8], index: 10, kind: input, shape index: {}]
  %s11 = inlined_call_operand.hbm [shape: f32[8,8], index: 11, kind: output, shape index: {}]
  %s12 = sld [smem:[#allocation0]]
  $region74: #{dqn_forward.1} parent=0
    _
  %s14 = ssub.s32 1, %s12
  %s15 = scalar_select 0, %s14, %s12
  $region1: #{dqn_forward.1} parent=0
    #allocation2 [shape = 'u8[12288]{0}', space=vmem, size = 0x3000, scoped, tag = 'input window, operand 1, single buffered']
    #allocation3 [shape = 's32[1]{0}', space=sflag, size = 0x4, scoped, tag = 'scoped memory for dqn_forward.1']
    #allocation4 [shape = 's32[1]{0}', space=sflag, size = 0x4, scoped, tag = 'scoped memory for dqn_forward.1']
    #allocation5 [shape = 'u8[65536]{0}', space=vmem, size = 0x10000, scoped, tag = 'input window, operand 3, single buffered']
    #allocation6 [shape = 's32[1]{0}', space=sflag, size = 0x4, scoped, tag = 'scoped memory for dqn_forward.1']
    #allocation7 [shape = 'u8[512]{0}', space=vmem, size = 0x400, scoped, tag = 'input window, operand 4, single buffered']
    #allocation8 [shape = 'u8[512]{0}', space=vmem, size = 0x400, scoped, tag = 'input window, operand 6, single buffered']
    #allocation9 [shape = 's32[1]{0}', space=sflag, size = 0x4, scoped, tag = 'scoped memory for dqn_forward.1']
    #allocation10 [shape = 'u8[32768]{0}', space=vmem, size = 0x8000, scoped, tag = 'input window, operand 7, single buffered']
    #allocation11 [shape = 'u8[4096]{0}', space=vmem, size = 0x1000, scoped, tag = 'output window, operand 0, single buffered']
    %16 = vsyncpa [#allocation3], 0
    %17 = vsyncpa [#allocation6], 0
    %18 = vsyncpa [#allocation9], 0
    %19 = vsyncpa [#allocation4], 0
    // Predicated region
    $region2: #{dqn_forward.1} parent=1 // pred_check
      _
    $region3: #{dqn_forward.1} parent=1 // pred_check_branch
      %21 = sbr.rel (0) target = $region5
    $region4: #{dqn_forward.1} parent=1 // pred_region
      _
    $region5: #{dqn_forward.1} parent=1 // pred_fallthru
      _
    // Predicated region
    $region6: #{dqn_forward.1} parent=1 // pred_check
      _
    $region7: #{dqn_forward.1} parent=1 // pred_check_branch
      %23 = sbr.rel (0) target = $region9
    $region8: #{dqn_forward.1} parent=1 // pred_region
      %s25 = ssub.s32 384, 384
      %26 = vsyncadd [#allocation3], %s25
      %s27 = sshll.u32 [#allocation2], 4
      %s28 = int_to_ptr.vmem [resolvable:$true] %s27
      %33 = dma.hbm_to_vmem [thread:$0]  %s1, 384, %s28, [#allocation3], 128, 128, 8
    $region9: #{dqn_forward.1} parent=1 // pred_fallthru
      _
    // Predicated region
    $region10: #{dqn_forward.1} parent=1 // pred_check
      _
    $region11: #{dqn_forward.1} parent=1 // pred_check_branch
      %35 = sbr.rel (0) target = $region13
    $region12: #{dqn_forward.1} parent=1 // pred_region
      _
    $region13: #{dqn_forward.1} parent=1 // pred_fallthru
      _
    // Predicated region
    $region14: #{dqn_forward.1} parent=1 // pred_check
      _
    $region15: #{dqn_forward.1} parent=1 // pred_check_branch
      %37 = sbr.rel (0) target = $region17
    $region16: #{dqn_forward.1} parent=1 // pred_region
      %s39 = ssub.s32 2048, 2048
      %40 = vsyncadd [#allocation6], %s39
      %s41 = sshll.u32 [#allocation5], 4
      %s42 = int_to_ptr.vmem [resolvable:$true] %s41
      %47 = dma.hbm_to_vmem [thread:$0]  %s3, 2048, %s42, [#allocation6], 64, 64, 4
    $region17: #{dqn_forward.1} parent=1 // pred_fallthru
      _
    // Predicated region
    $region18: #{dqn_forward.1} parent=1 // pred_check
      _
    $region19: #{dqn_forward.1} parent=1 // pred_check_branch
      %49 = sbr.rel (0) target = $region21
    $region20: #{dqn_forward.1} parent=1 // pred_region
      %s51 = ssub.s32 16, 16
      %52 = vsyncadd [#allocation6], %s51
      %s54 = sshll.u32 [#allocation7], 4
      %s55 = int_to_ptr.vmem [resolvable:$true] %s54
      %57 = dma.hbm_to_vmem [thread:$0]  %s4, 16, %s55, [#allocation6]
    $region21: #{dqn_forward.1} parent=1 // pred_fallthru
      _
    // Predicated region
    $region22: #{dqn_forward.1} parent=1 // pred_check
      _
    $region23: #{dqn_forward.1} parent=1 // pred_check_branch
      %59 = sbr.rel (0) target = $region25
    $region24: #{dqn_forward.1} parent=1 // pred_region
      _
    $region25: #{dqn_forward.1} parent=1 // pred_fallthru
      _
    // Predicated region
    $region26: #{dqn_forward.1} parent=1 // pred_check
      _
    $region27: #{dqn_forward.1} parent=1 // pred_check_branch
      %61 = sbr.rel (0) target = $region29
    $region28: #{dqn_forward.1} parent=1 // pred_region
      %s63 = ssub.s32 16, 16
      %64 = vsyncadd [#allocation9], %s63
      %s66 = sshll.u32 [#allocation8], 4
      %s67 = int_to_ptr.vmem [resolvable:$true] %s66
      %69 = dma.hbm_to_vmem [thread:$0]  %s6, 16, %s67, [#allocation9]
    $region29: #{dqn_forward.1} parent=1 // pred_fallthru
      _
    // Predicated region
    $region30: #{dqn_forward.1} parent=1 // pred_check
      _
    $region31: #{dqn_forward.1} parent=1 // pred_check_branch
      %71 = sbr.rel (0) target = $region33
    $region32: #{dqn_forward.1} parent=1 // pred_region
      %s73 = ssub.s32 1024, 1024
      %74 = vsyncadd [#allocation9], %s73
      %s75 = sshll.u32 [#allocation10], 4
      %s76 = int_to_ptr.vmem [resolvable:$true] %s75
      %81 = dma.hbm_to_vmem [thread:$0]  %s7, 1024, %s76, [#allocation9], 64, 64, 4
    $region33: #{dqn_forward.1} parent=1 // pred_fallthru
      _
    // Predicated region
    $region34: #{dqn_forward.1} parent=1 // pred_check
      _
    $region35: #{dqn_forward.1} parent=1 // pred_check_branch
      %83 = sbr.rel (0) target = $region37
    $region36: #{dqn_forward.1} parent=1 // pred_region
      _
    $region37: #{dqn_forward.1} parent=1 // pred_fallthru
      _
    // Predicated region
    $region38: #{dqn_forward.1} parent=1 // pred_check
      _
    $region39: #{dqn_forward.1} parent=1 // pred_check_branch
      %85 = sbr.rel (0) target = $region41
    $region40: #{dqn_forward.1} parent=1 // pred_region
      _
    $region41: #{dqn_forward.1} parent=1 // pred_fallthru
      _
    // Predicated region
    $region42: #{dqn_forward.1} parent=1 // pred_check
      _
    $region43: #{dqn_forward.1} parent=1 // pred_check_branch
      %87 = sbr.rel (0) target = $region45
    $region44: #{dqn_forward.1} parent=1 // pred_region
      _
    $region45: #{dqn_forward.1} parent=1 // pred_fallthru
      _
    // Predicated region
    $region46: #{dqn_forward.1} parent=1 // pred_check
      _
    $region47: #{dqn_forward.1} parent=1 // pred_check_branch
      %89 = sbr.rel (0) target = $region49
    $region48: #{dqn_forward.1} parent=1 // pred_region
      %90 = dma.done [#allocation3], 384
    $region49: #{dqn_forward.1} parent=1 // pred_fallthru
      _
    // Predicated region
    $region50: #{dqn_forward.1} parent=1 // pred_check
      _
    $region51: #{dqn_forward.1} parent=1 // pred_check_branch
      %92 = sbr.rel (0) target = $region53
    $region52: #{dqn_forward.1} parent=1 // pred_region
      %93 = dma.done [#allocation6], 2048
    $region53: #{dqn_forward.1} parent=1 // pred_fallthru
      _
    // Predicated region
    $region54: #{dqn_forward.1} parent=1 // pred_check
      _
    $region55: #{dqn_forward.1} parent=1 // pred_check_branch
      %95 = sbr.rel (0) target = $region57
    $region56: #{dqn_forward.1} parent=1 // pred_region
      %96 = dma.done [#allocation6], 16
    $region57: #{dqn_forward.1} parent=1 // pred_fallthru
      _
    // Predicated region
    $region58: #{dqn_forward.1} parent=1 // pred_check
      _
    $region59: #{dqn_forward.1} parent=1 // pred_check_branch
      %98 = sbr.rel (0) target = $region61
    $region60: #{dqn_forward.1} parent=1 // pred_region
      %99 = dma.done [#allocation9], 16
    $region61: #{dqn_forward.1} parent=1 // pred_fallthru
      _
    // Predicated region
    $region62: #{dqn_forward.1} parent=1 // pred_check
      _
    $region63: #{dqn_forward.1} parent=1 // pred_check_branch
      %101 = sbr.rel (0) target = $region65
    $region64: #{dqn_forward.1} parent=1 // pred_region
      %102 = dma.done [#allocation9], 1024
    $region65: #{dqn_forward.1} parent=1 // pred_fallthru
      _
    %v104 = vld [vmem:[%s0] sm:$0xff]
    %v105 = vpack.c.bf16 %v104, %v104
    %v106 = vld [vmem:[#allocation2] sm:$0xff]
    %v107 = vld [vmem:[#allocation2 + $0x8] sm:$0xff]
    %v108 = vld [vmem:[#allocation2 + $0x10] sm:$0xff]
    %v109 = vld [vmem:[%s2] sm:$0x3]
    %v111 = vlaneseq
    %v112 = vshrl.u32 %v111, 7
    %v113 = vsub.s32 0, %v112
    %v114 = vrot.slane %v109, %v113
    %v115 = vlaneseq
    %v116 = vshrl.u32 %v115, 7
    %v117 = vsub.s32 1, %v116
    %v118 = vrot.slane %v109, %v117
    %v124 = vunpack.c.l.b16 %v106
    %v125 = vunpack.c.h.b16 %v106
    %v126 = vunpack.c.l.b16 %v107
    %v127 = vunpack.c.h.b16 %v107
    %v128 = vunpack.c.l.b16 %v108
    %v129 = vunpack.c.h.b16 %v108
    %v130 = vpack.c.b16 %v126, %v124
    %v131 = vpack.c.b16 %v127, %v125
    %v132 = vpack.c.b16 %v128, %v128
    %v133 = vpack.c.b16 %v129, %v129
    %vm136 = vcmask 195584
    %v138 = vsel %vm136, %v105, 0
    %vm140 = vcmask 1043456
    %v142 = vsel %vm140, %v132, 0
    %v145 = vsel %vm140, %v133, 0
    %147 = vmatprep.subr.bf16.mxu0 0
    %148 = vmatpush1.bf16.msra.mxu0 0
    %149 = vmatprep.subr.bf16.mxu0 0
    %150 = vmatpush1.bf16.msra.mxu0 0
    %151 = vmatprep.subr.bf16.mxu0 0
    %152 = vmatpush1.bf16.msra.mxu0 0
    %153 = vmatprep.subr.bf16.mxu0 0
    %154 = vmatpush1.bf16.msra.mxu0 0
    %155 = vmatprep.subr.bf16.mxu0 0
    %156 = vmatpush1.bf16.msra.mxu0 0
    %157 = vmatprep.subr.bf16.mxu0 0
    %158 = vmatpush1.bf16.msra.mxu0 0
    %159 = vmatprep.subr.bf16.mxu0 %v145
    %160 = vmatpush1.bf16.msra.mxu0 %v142
    %161 = vmatprep.subr.bf16.mxu0 %v131
    %162 = vmatpush1.bf16.msra.mxu0 %v130
    %163 = vmatprep.subr.bf16.mxu0 0
    %164 = vmatpush2.bf16.msra.mxu0 0
    %165 = vmatprep.subr.bf16.mxu0 0
    %166 = vmatpush2.bf16.msra.mxu0 0
    %167 = vmatprep.subr.bf16.mxu0 0
    %168 = vmatpush2.bf16.msra.mxu0 0
    %169 = vmatprep.subr.bf16.mxu0 0
    %170 = vmatpush2.bf16.msra.mxu0 0
    %171 = vmatprep.subr.bf16.mxu0 0
    %172 = vmatpush2.bf16.msra.mxu0 0
    %173 = vmatprep.subr.bf16.mxu0 0
    %174 = vmatpush2.bf16.msra.mxu0 0
    %175 = vmatprep.subr.bf16.mxu0 0
    %176 = vmatpush2.bf16.msra.mxu0 0
    %177 = vmatprep.subr.bf16.mxu0 0
    %178 = vmatpush2.bf16.msra.mxu0 0
    %179 = vmatprep.mubr.bf16.mxu0 0
    %180 = vmatmul.mubr.bf16.gmra.mxu0 %v138
    %v181 = vpop.f32.mrf.mxu0
    %v182 = vadd.f32 %v114, %v181
    %v183 = vpop.f32.mrf.mxu0
    %v184 = vadd.f32 %v118, %v183
    %v185 = vpop.f32.mrf.mxu0
    %v186 = vpop.f32.mrf.mxu0
    %187 = vdwg.mxu0
    %vm188 = vcmp.ge.f32.partialorder %v182, 0.0
    %vm189 = vcmp.ge.f32.partialorder %v184, 0.0
    %v190 = vmul.f32 %v182, 0.01
    %v191 = vmul.f32 %v184, 0.01
    %v192 = vsel %vm188, %v182, %v190
    %v193 = vsel %vm189, %v184, %v191
    %v194 = vpack.c.bf16 %v192, %v192
    %v195 = vpack.c.bf16 %v193, %v193
    %v196 = vld [vmem:[#allocation5] sm:$0xf]
    %v197 = vld [vmem:[#allocation5 + $0x4] sm:$0xf]
    %v198 = vld [vmem:[#allocation5 + $0x8] sm:$0xf]
    %v199 = vld [vmem:[#allocation5 + $0xc] sm:$0xf]
    %v200 = vld [vmem:[#allocation5 + $0x10] sm:$0xf]
    %v201 = vld [vmem:[#allocation5 + $0x14] sm:$0xf]
    %v202 = vld [vmem:[#allocation5 + $0x18] sm:$0xf]
    %v203 = vld [vmem:[#allocation5 + $0x1c] sm:$0xf]
    %v204 = vld [vmem:[#allocation5 + $0x20] sm:$0xf]
    %v205 = vld [vmem:[#allocation5 + $0x24] sm:$0xf]
    %v206 = vld [vmem:[#allocation5 + $0x28] sm:$0xf]
    %v207 = vld [vmem:[#allocation5 + $0x2c] sm:$0xf]
    %v208 = vld [vmem:[#allocation5 + $0x30] sm:$0xf]
    %v209 = vld [vmem:[#allocation5 + $0x34] sm:$0xf]
    %v210 = vld [vmem:[#allocation5 + $0x38] sm:$0xf]
    %v211 = vld [vmem:[#allocation5 + $0x3c] sm:$0xf]
    %v212 = vld [vmem:[#allocation5 + $0x40] sm:$0xf]
    %v213 = vld [vmem:[#allocation5 + $0x44] sm:$0xf]
    %v214 = vld [vmem:[#allocation5 + $0x48] sm:$0xf]
    %v215 = vld [vmem:[#allocation5 + $0x4c] sm:$0xf]
    %v216 = vld [vmem:[#allocation5 + $0x50] sm:$0xf]
    %v217 = vld [vmem:[#allocation5 + $0x54] sm:$0xf]
    %v218 = vld [vmem:[#allocation5 + $0x58] sm:$0xf]
    %v219 = vld [vmem:[#allocation5 + $0x5c] sm:$0xf]
    %v220 = vld [vmem:[#allocation5 + $0x60] sm:$0xf]
    %v221 = vld [vmem:[#allocation5 + $0x64] sm:$0xf]
    %v222 = vld [vmem:[#allocation5 + $0x68] sm:$0xf]
    %v223 = vld [vmem:[#allocation5 + $0x6c] sm:$0xf]
    %v224 = vld [vmem:[#allocation5 + $0x70] sm:$0xf]
    %v225 = vld [vmem:[#allocation5 + $0x74] sm:$0xf]
    %v226 = vld [vmem:[#allocation5 + $0x78] sm:$0xf]
    %v227 = vld [vmem:[#allocation5 + $0x7c] sm:$0xf]
    %v228 = vld [vmem:[#allocation7] sm:$0x1]
    %v230 = vlaneseq
    %v231 = vshrl.u32 %v230, 7
    %v232 = vsub.s32 0, %v231
    %v233 = vrot.slane %v228, %v232
    %v267 = vunpack.c.l.b16 %v196
    %v268 = vunpack.c.l.b16 %v197
    %v269 = vunpack.c.l.b16 %v198
    %v270 = vunpack.c.l.b16 %v199
    %v271 = vunpack.c.l.b16 %v200
    %v272 = vunpack.c.l.b16 %v201
    %v273 = vunpack.c.l.b16 %v202
    %v274 = vunpack.c.l.b16 %v203
    %v275 = vunpack.c.l.b16 %v204
    %v276 = vunpack.c.l.b16 %v205
    %v277 = vunpack.c.l.b16 %v206
    %v278 = vunpack.c.l.b16 %v207
    %v279 = vunpack.c.l.b16 %v208
    %v280 = vunpack.c.l.b16 %v209
    %v281 = vunpack.c.l.b16 %v210
    %v282 = vunpack.c.l.b16 %v211
    %v283 = vunpack.c.l.b16 %v212
    %v284 = vunpack.c.l.b16 %v213
    %v285 = vunpack.c.l.b16 %v214
    %v286 = vunpack.c.l.b16 %v215
    %v287 = vunpack.c.l.b16 %v216
    %v288 = vunpack.c.l.b16 %v217
    %v289 = vunpack.c.l.b16 %v218
    %v290 = vunpack.c.l.b16 %v219
    %v291 = vunpack.c.l.b16 %v220
    %v292 = vunpack.c.l.b16 %v221
    %v293 = vunpack.c.l.b16 %v222
    %v294 = vunpack.c.l.b16 %v223
    %v295 = vunpack.c.l.b16 %v224
    %v296 = vunpack.c.l.b16 %v225
    %v297 = vunpack.c.l.b16 %v226
    %v298 = vunpack.c.l.b16 %v227
    %v299 = vpack.c.b16 %v268, %v267
    %v300 = vpack.c.b16 %v270, %v269
    %v301 = vpack.c.b16 %v272, %v271
    %v302 = vpack.c.b16 %v274, %v273
    %v303 = vpack.c.b16 %v276, %v275
    %v304 = vpack.c.b16 %v278, %v277
    %v305 = vpack.c.b16 %v280, %v279
    %v306 = vpack.c.b16 %v282, %v281
    %v307 = vpack.c.b16 %v284, %v283
    %v308 = vpack.c.b16 %v286, %v285
    %v309 = vpack.c.b16 %v288, %v287
    %v310 = vpack.c.b16 %v290, %v289
    %v311 = vpack.c.b16 %v292, %v291
    %v312 = vpack.c.b16 %v294, %v293
    %v313 = vpack.c.b16 %v296, %v295
    %v314 = vpack.c.b16 %v298, %v297
    %331 = vmatprep.subr.bf16.mxu0 0
    %332 = vmatpush1.bf16.msra.mxu0 %v306
    %333 = vmatprep.subr.bf16.mxu0 0
    %334 = vmatpush1.bf16.msra.mxu0 %v305
    %335 = vmatprep.subr.bf16.mxu0 0
    %336 = vmatpush1.bf16.msra.mxu0 %v304
    %337 = vmatprep.subr.bf16.mxu0 0
    %338 = vmatpush1.bf16.msra.mxu0 %v303
    %339 = vmatprep.subr.bf16.mxu0 0
    %340 = vmatpush1.bf16.msra.mxu0 %v302
    %341 = vmatprep.subr.bf16.mxu0 0
    %342 = vmatpush1.bf16.msra.mxu0 %v301
    %343 = vmatprep.subr.bf16.mxu0 0
    %344 = vmatpush1.bf16.msra.mxu0 %v300
    %345 = vmatprep.subr.bf16.mxu0 0
    %346 = vmatpush1.bf16.msra.mxu0 %v299
    %347 = vmatprep.subr.bf16.mxu0 0
    %348 = vmatpush2.bf16.msra.mxu0 %v314
    %349 = vmatprep.subr.bf16.mxu0 0
    %350 = vmatpush2.bf16.msra.mxu0 %v313
    %351 = vmatprep.subr.bf16.mxu0 0
    %352 = vmatpush2.bf16.msra.mxu0 %v312
    %353 = vmatprep.subr.bf16.mxu0 0
    %354 = vmatpush2.bf16.msra.mxu0 %v311
    %355 = vmatprep.subr.bf16.mxu0 0
    %356 = vmatpush2.bf16.msra.mxu0 %v310
    %357 = vmatprep.subr.bf16.mxu0 0
    %358 = vmatpush2.bf16.msra.mxu0 %v309
    %359 = vmatprep.subr.bf16.mxu0 0
    %360 = vmatpush2.bf16.msra.mxu0 %v308
    %361 = vmatprep.subr.bf16.mxu0 0
    %362 = vmatpush2.bf16.msra.mxu0 %v307
    %363 = vmatprep.mubr.bf16.mxu0 %v195
    %364 = vmatmul.mubr.bf16.gmra.mxu0 %v194
    %v365 = vpop.f32.mrf.mxu0
    %v366 = vadd.f32 %v233, %v365
    %v367 = vpop.f32.mrf.mxu0
    %v368 = vpop.f32.mrf.mxu0
    %v369 = vpop.f32.mrf.mxu0
    %370 = vdwg.mxu0
    %vm371 = vcmp.ge.f32.partialorder %v366, 0.0
    %v372 = vmul.f32 %v366, 0.01
    %v373 = vsel %vm371, %v366, %v372
    %v374 = vpack.c.bf16 %v373, %v373
    %v375 = vld [vmem:[%s5] sm:$0xf]
    %v376 = vld [vmem:[%s5 + $0x4] sm:$0xf]
    %v377 = vld [vmem:[%s5 + $0x8] sm:$0xf]
    %v378 = vld [vmem:[%s5 + $0xc] sm:$0xf]
    %v379 = vld [vmem:[%s5 + $0x10] sm:$0xf]
    %v380 = vld [vmem:[%s5 + $0x14] sm:$0xf]
    %v381 = vld [vmem:[%s5 + $0x18] sm:$0xf]
    %v382 = vld [vmem:[%s5 + $0x1c] sm:$0xf]
    %v383 = vld [vmem:[%s5 + $0x20] sm:$0xf]
    %v384 = vld [vmem:[%s5 + $0x24] sm:$0xf]
    %v385 = vld [vmem:[%s5 + $0x28] sm:$0xf]
    %v386 = vld [vmem:[%s5 + $0x2c] sm:$0xf]
    %v387 = vld [vmem:[%s5 + $0x30] sm:$0xf]
    %v388 = vld [vmem:[%s5 + $0x34] sm:$0xf]
    %v389 = vld [vmem:[%s5 + $0x38] sm:$0xf]
    %v390 = vld [vmem:[%s5 + $0x3c] sm:$0xf]
    %v391 = vld [vmem:[#allocation8] sm:$0x1]
    %v393 = vlaneseq
    %v394 = vshrl.u32 %v393, 7
    %v395 = vsub.s32 0, %v394
    %v396 = vrot.slane %v391, %v395
    %v414 = vunpack.c.l.b16 %v375
    %v415 = vunpack.c.l.b16 %v376
    %v416 = vunpack.c.l.b16 %v377
    %v417 = vunpack.c.l.b16 %v378
    %v418 = vunpack.c.l.b16 %v379
    %v419 = vunpack.c.l.b16 %v380
    %v420 = vunpack.c.l.b16 %v381
    %v421 = vunpack.c.l.b16 %v382
    %v422 = vunpack.c.l.b16 %v383
    %v423 = vunpack.c.l.b16 %v384
    %v424 = vunpack.c.l.b16 %v385
    %v425 = vunpack.c.l.b16 %v386
    %v426 = vunpack.c.l.b16 %v387
    %v427 = vunpack.c.l.b16 %v388
    %v428 = vunpack.c.l.b16 %v389
    %v429 = vunpack.c.l.b16 %v390
    %v430 = vpack.c.b16 %v415, %v414
    %v431 = vpack.c.b16 %v417, %v416
    %v432 = vpack.c.b16 %v419, %v418
    %v433 = vpack.c.b16 %v421, %v420
    %v434 = vpack.c.b16 %v423, %v422
    %v435 = vpack.c.b16 %v425, %v424
    %v436 = vpack.c.b16 %v427, %v426
    %v437 = vpack.c.b16 %v429, %v428
    %446 = vmatprep.subr.bf16.mxu0 0
    %447 = vmatpush1.bf16.msra.mxu0 %v437
    %448 = vmatprep.subr.bf16.mxu0 0
    %449 = vmatpush1.bf16.msra.mxu0 %v436
    %450 = vmatprep.subr.bf16.mxu0 0
    %451 = vmatpush1.bf16.msra.mxu0 %v435
    %452 = vmatprep.subr.bf16.mxu0 0
    %453 = vmatpush1.bf16.msra.mxu0 %v434
    %454 = vmatprep.subr.bf16.mxu0 0
    %455 = vmatpush1.bf16.msra.mxu0 %v433
    %456 = vmatprep.subr.bf16.mxu0 0
    %457 = vmatpush1.bf16.msra.mxu0 %v432
    %458 = vmatprep.subr.bf16.mxu0 0
    %459 = vmatpush1.bf16.msra.mxu0 %v431
    %460 = vmatprep.subr.bf16.mxu0 0
    %461 = vmatpush1.bf16.msra.mxu0 %v430
    %462 = vmatprep.subr.bf16.mxu0 0
    %463 = vmatpush2.bf16.msra.mxu0 0
    %464 = vmatprep.subr.bf16.mxu0 0
    %465 = vmatpush2.bf16.msra.mxu0 0
    %466 = vmatprep.subr.bf16.mxu0 0
    %467 = vmatpush2.bf16.msra.mxu0 0
    %468 = vmatprep.subr.bf16.mxu0 0
    %469 = vmatpush2.bf16.msra.mxu0 0
    %470 = vmatprep.subr.bf16.mxu0 0
    %471 = vmatpush2.bf16.msra.mxu0 0
    %472 = vmatprep.subr.bf16.mxu0 0
    %473 = vmatpush2.bf16.msra.mxu0 0
    %474 = vmatprep.subr.bf16.mxu0 0
    %475 = vmatpush2.bf16.msra.mxu0 0
    %476 = vmatprep.subr.bf16.mxu0 0
    %477 = vmatpush2.bf16.msra.mxu0 0
    %478 = vmatprep.mubr.bf16.mxu0 0
    %479 = vmatmul.mubr.bf16.gmra.mxu0 %v374
    %v480 = vpop.f32.mrf.mxu0
    %v481 = vadd.f32 %v396, %v480
    %v482 = vpop.f32.mrf.mxu0
    %v483 = vpop.f32.mrf.mxu0
    %v484 = vpop.f32.mrf.mxu0
    %485 = vdwg.mxu0
    %vm486 = vcmp.ge.f32.partialorder %v481, 0.0
    %v487 = vmul.f32 %v481, 0.01
    %v488 = vsel %vm486, %v481, %v487
    %v489 = vpack.c.bf16 %v488, %v488
    %v490 = vld [vmem:[#allocation10] sm:$0xf]
    %v491 = vld [vmem:[#allocation10 + $0x4] sm:$0xf]
    %v492 = vld [vmem:[#allocation10 + $0x8] sm:$0xf]
    %v493 = vld [vmem:[#allocation10 + $0xc] sm:$0xf]
    %v494 = vld [vmem:[#allocation10 + $0x10] sm:$0xf]
    %v495 = vld [vmem:[#allocation10 + $0x14] sm:$0xf]
    %v496 = vld [vmem:[#allocation10 + $0x18] sm:$0xf]
    %v497 = vld [vmem:[#allocation10 + $0x1c] sm:$0xf]
    %v498 = vld [vmem:[#allocation10 + $0x20] sm:$0xf]
    %v499 = vld [vmem:[#allocation10 + $0x24] sm:$0xf]
    %v500 = vld [vmem:[#allocation10 + $0x28] sm:$0xf]
    %v501 = vld [vmem:[#allocation10 + $0x2c] sm:$0xf]
    %v502 = vld [vmem:[#allocation10 + $0x30] sm:$0xf]
    %v503 = vld [vmem:[#allocation10 + $0x34] sm:$0xf]
    %v504 = vld [vmem:[#allocation10 + $0x38] sm:$0xf]
    %v505 = vld [vmem:[#allocation10 + $0x3c] sm:$0xf]
    %v506 = vld [vmem:[%s8] sm:$0x1]
    %v508 = vlaneseq
    %v509 = vshrl.u32 %v508, 7
    %v510 = vsub.s32 0, %v509
    %v511 = vrot.slane %v506, %v510
    %v529 = vunpack.c.l.b16 %v490
    %v530 = vunpack.c.l.b16 %v491
    %v531 = vunpack.c.l.b16 %v492
    %v532 = vunpack.c.l.b16 %v493
    %v533 = vunpack.c.l.b16 %v494
    %v534 = vunpack.c.l.b16 %v495
    %v535 = vunpack.c.l.b16 %v496
    %v536 = vunpack.c.l.b16 %v497
    %v537 = vunpack.c.l.b16 %v498
    %v538 = vunpack.c.l.b16 %v499
    %v539 = vunpack.c.l.b16 %v500
    %v540 = vunpack.c.l.b16 %v501
    %v541 = vunpack.c.l.b16 %v502
    %v542 = vunpack.c.l.b16 %v503
    %v543 = vunpack.c.l.b16 %v504
    %v544 = vunpack.c.l.b16 %v505
    %v545 = vpack.c.b16 %v530, %v529
    %v546 = vpack.c.b16 %v532, %v531
    %v547 = vpack.c.b16 %v534, %v533
    %v548 = vpack.c.b16 %v536, %v535
    %v549 = vpack.c.b16 %v538, %v537
    %v550 = vpack.c.b16 %v540, %v539
    %v551 = vpack.c.b16 %v542, %v541
    %v552 = vpack.c.b16 %v544, %v543
    %561 = vmatprep.subr.bf16.mxu0 0
    %562 = vmatpush1.bf16.msra.mxu0 %v552
    %563 = vmatprep.subr.bf16.mxu0 0
    %564 = vmatpush1.bf16.msra.mxu0 %v551
    %565 = vmatprep.subr.bf16.mxu0 0
    %566 = vmatpush1.bf16.msra.mxu0 %v550
    %567 = vmatprep.subr.bf16.mxu0 0
    %568 = vmatpush1.bf16.msra.mxu0 %v549
    %569 = vmatprep.subr.bf16.mxu0 0
    %570 = vmatpush1.bf16.msra.mxu0 %v548
    %571 = vmatprep.subr.bf16.mxu0 0
    %572 = vmatpush1.bf16.msra.mxu0 %v547
    %573 = vmatprep.subr.bf16.mxu0 0
    %574 = vmatpush1.bf16.msra.mxu0 %v546
    %575 = vmatprep.subr.bf16.mxu0 0
    %576 = vmatpush1.bf16.msra.mxu0 %v545
    %577 = vmatprep.subr.bf16.mxu0 0
    %578 = vmatpush2.bf16.msra.mxu0 0
    %579 = vmatprep.subr.bf16.mxu0 0
    %580 = vmatpush2.bf16.msra.mxu0 0
    %581 = vmatprep.subr.bf16.mxu0 0
    %582 = vmatpush2.bf16.msra.mxu0 0
    %583 = vmatprep.subr.bf16.mxu0 0
    %584 = vmatpush2.bf16.msra.mxu0 0
    %585 = vmatprep.subr.bf16.mxu0 0
    %586 = vmatpush2.bf16.msra.mxu0 0
    %587 = vmatprep.subr.bf16.mxu0 0
    %588 = vmatpush2.bf16.msra.mxu0 0
    %589 = vmatprep.subr.bf16.mxu0 0
    %590 = vmatpush2.bf16.msra.mxu0 0
    %591 = vmatprep.subr.bf16.mxu0 0
    %592 = vmatpush2.bf16.msra.mxu0 0
    %593 = vmatprep.mubr.bf16.mxu0 0
    %594 = vmatmul.mubr.bf16.gmra.mxu0 %v489
    %v595 = vpop.f32.mrf.mxu0
    %v596 = vadd.f32 %v511, %v595
    %v597 = vpop.f32.mrf.mxu0
    %v598 = vpop.f32.mrf.mxu0
    %v599 = vpop.f32.mrf.mxu0
    %600 = vdwg.mxu0
    %vm601 = vcmp.ge.f32.partialorder %v596, 0.0
    %v602 = vmul.f32 %v596, 0.01
    %v603 = vsel %vm601, %v596, %v602
    %v604 = vpack.c.bf16 %v603, %v603
    %v605 = vld [vmem:[%s9] sm:$0xf]
    %v606 = vld [vmem:[%s9 + $0x4] sm:$0xf]
    %v607 = vld [vmem:[%s9 + $0x8] sm:$0xf]
    %v608 = vld [vmem:[%s9 + $0xc] sm:$0xf]
    %v609 = vld [vmem:[%s9 + $0x10] sm:$0xf]
    %v610 = vld [vmem:[%s9 + $0x14] sm:$0xf]
    %v611 = vld [vmem:[%s9 + $0x18] sm:$0xf]
    %v612 = vld [vmem:[%s9 + $0x1c] sm:$0xf]
    %v613 = vld [vmem:[%s9 + $0x20] sm:$0xf]
    %v614 = vld [vmem:[%s9 + $0x24] sm:$0xf]
    %v615 = vld [vmem:[%s9 + $0x28] sm:$0xf]
    %v616 = vld [vmem:[%s9 + $0x2c] sm:$0xf]
    %v617 = vld [vmem:[%s9 + $0x30] sm:$0xf]
    %v618 = vld [vmem:[%s9 + $0x34] sm:$0xf]
    %v619 = vld [vmem:[%s9 + $0x38] sm:$0xf]
    %v620 = vld [vmem:[%s9 + $0x3c] sm:$0xf]
    %v621 = vld [vmem:[%s10] sm:$0x1]
    %v623 = vlaneseq
    %v624 = vshrl.u32 %v623, 7
    %v625 = vsub.s32 0, %v624
    %v626 = vrot.slane %v621, %v625
    %v644 = vunpack.c.l.b16 %v605
    %v645 = vunpack.c.l.b16 %v606
    %v646 = vunpack.c.l.b16 %v607
    %v647 = vunpack.c.l.b16 %v608
    %v648 = vunpack.c.l.b16 %v609
    %v649 = vunpack.c.l.b16 %v610
    %v650 = vunpack.c.l.b16 %v611
    %v651 = vunpack.c.l.b16 %v612
    %v652 = vunpack.c.l.b16 %v613
    %v653 = vunpack.c.l.b16 %v614
    %v654 = vunpack.c.l.b16 %v615
    %v655 = vunpack.c.l.b16 %v616
    %v656 = vunpack.c.l.b16 %v617
    %v657 = vunpack.c.l.b16 %v618
    %v658 = vunpack.c.l.b16 %v619
    %v659 = vunpack.c.l.b16 %v620
    %v660 = vpack.c.b16 %v645, %v644
    %v661 = vpack.c.b16 %v647, %v646
    %v662 = vpack.c.b16 %v649, %v648
    %v663 = vpack.c.b16 %v651, %v650
    %v664 = vpack.c.b16 %v653, %v652
    %v665 = vpack.c.b16 %v655, %v654
    %v666 = vpack.c.b16 %v657, %v656
    %v667 = vpack.c.b16 %v659, %v658
    %676 = vmatprep.subr.bf16.mxu0 0
    %677 = vmatpush1.bf16.msra.mxu0 %v667
    %678 = vmatprep.subr.bf16.mxu0 0
    %679 = vmatpush1.bf16.msra.mxu0 %v666
    %680 = vmatprep.subr.bf16.mxu0 0
    %681 = vmatpush1.bf16.msra.mxu0 %v665
    %682 = vmatprep.subr.bf16.mxu0 0
    %683 = vmatpush1.bf16.msra.mxu0 %v664
    %684 = vmatprep.subr.bf16.mxu0 0
    %685 = vmatpush1.bf16.msra.mxu0 %v663
    %686 = vmatprep.subr.bf16.mxu0 0
    %687 = vmatpush1.bf16.msra.mxu0 %v662
    %688 = vmatprep.subr.bf16.mxu0 0
    %689 = vmatpush1.bf16.msra.mxu0 %v661
    %690 = vmatprep.subr.bf16.mxu0 0
    %691 = vmatpush1.bf16.msra.mxu0 %v660
    %692 = vmatprep.subr.bf16.mxu0 0
    %693 = vmatpush2.bf16.msra.mxu0 0
    %694 = vmatprep.subr.bf16.mxu0 0
    %695 = vmatpush2.bf16.msra.mxu0 0
    %696 = vmatprep.subr.bf16.mxu0 0
    %697 = vmatpush2.bf16.msra.mxu0 0
    %698 = vmatprep.subr.bf16.mxu0 0
    %699 = vmatpush2.bf16.msra.mxu0 0
    %700 = vmatprep.subr.bf16.mxu0 0
    %701 = vmatpush2.bf16.msra.mxu0 0
    %702 = vmatprep.subr.bf16.mxu0 0
    %703 = vmatpush2.bf16.msra.mxu0 0
    %704 = vmatprep.subr.bf16.mxu0 0
    %705 = vmatpush2.bf16.msra.mxu0 0
    %706 = vmatprep.subr.bf16.mxu0 0
    %707 = vmatpush2.bf16.msra.mxu0 0
    %708 = vmatprep.mubr.bf16.mxu0 0
    %709 = vmatmul.mubr.bf16.gmra.mxu0 %v604
    %v710 = vpop.f32.mrf.mxu0
    %v711 = vadd.f32 %v626, %v710
    %v712 = vpop.f32.mrf.mxu0
    %v713 = vpop.f32.mrf.mxu0
    %v714 = vpop.f32.mrf.mxu0
    %715 = vdwg.mxu0
    %vm716 = vcmask 64512
    %717 = vst.msk [vmem:[#allocation11] sm:$0xff] %vm716, %v711
    // Predicated region
    $region66: #{dqn_forward.1} parent=1 // pred_check
      _
    $region67: #{dqn_forward.1} parent=1 // pred_check_branch
      %719 = sbr.rel (0) target = $region69
    $region68: #{dqn_forward.1} parent=1 // pred_region
      %s721 = ssub.s32 128, 128
      %722 = vsyncadd [#allocation4], %s721
      %s724 = sshll.u32 [#allocation11], 4
      %s725 = int_to_ptr.vmem [resolvable:$true] %s724
      %727 = dma.vmem_to_hbm [thread:$0]  %s725, 128, %s11, [#allocation4]
    $region69: #{dqn_forward.1} parent=1 // pred_fallthru
      _
    // Predicated region
    $region70: #{dqn_forward.1} parent=1 // pred_check
      _
    $region71: #{dqn_forward.1} parent=1 // pred_check_branch
      %729 = sbr.rel (0) target = $region73
    $region72: #{dqn_forward.1} parent=1 // pred_region
      %730 = dma.done [#allocation4], 128
    $region73: #{dqn_forward.1} parent=1 // pred_fallthru
      _
    %731 = vsyncpa [#allocation3], 1
    %732 = vsyncpa [#allocation6], 1
    %733 = vsyncpa [#allocation9], 1
    %734 = vsyncpa [#allocation4], 1

</llo_original>
